<compile_context>
chip_gen: v7x
topology: tpu7x:2x2x1
jax: 0.10.0
libtpu: 0.0.40
codegen_flags: <defaults>
</compile_context>

<pallas_src>
import jax
import jax.numpy as jnp
from jax.experimental import pallas as pl
from jax.experimental.pallas import tpu as pltpu

STATE_DIM = 100
GOAL_DIM = 50
HIDDEN_DIMS = (256, 128, 64)
N_GOAL_TYPES = 10      # len(GoalType)
N_PRIORITIES = 5       # len(GoalPriority)

HEAD_PAD = 128         # packed head-output lane width (68 real lanes + zero pad)

# packed head-output lane layout
_TYPE_LO, _TYPE_HI = 0, N_GOAL_TYPES                     # [ 0, 10)  softmax
_PRIO_LO, _PRIO_HI = _TYPE_HI, _TYPE_HI + N_PRIORITIES   # [10, 15)  softmax
_EFF = _PRIO_HI                                          # 15        sigmoid
_VAL = _EFF + 1                                          # 16        sigmoid
_SUC = _VAL + 1                                          # 17        sigmoid
_GF_LO, _GF_HI = _SUC + 1, _SUC + 1 + GOAL_DIM           # [18, 68)  tanh


def _round_up(x, m):
    return ((x + m - 1) // m) * m


def _goal_gen_kernel(x_ref, w1_ref, b1_ref, w2_ref, b2_ref, w3_ref, b3_ref,
                     wh_ref, bh_ref, out_ref):
    # --- feature extractor: 3 x (Linear -> ReLU); Dropout == identity (eval) ---
    x = x_ref[...].astype(jnp.bfloat16)                         # [TB, 100]
    h = jnp.dot(x, w1_ref[...],
                preferred_element_type=jnp.float32) + b1_ref[...]
    h = jnp.maximum(h, 0.0)
    h = jnp.dot(h.astype(jnp.bfloat16), w2_ref[...],
                preferred_element_type=jnp.float32) + b2_ref[...]
    h = jnp.maximum(h, 0.0)
    h = jnp.dot(h.astype(jnp.bfloat16), w3_ref[...],
                preferred_element_type=jnp.float32) + b3_ref[...]
    h = jnp.maximum(h, 0.0)                                     # [TB, 64]

    # --- all six heads fused into one MXU pass ---
    heads = jnp.dot(h.astype(jnp.bfloat16), wh_ref[...],
                    preferred_element_type=jnp.float32) + bh_ref[...]  # [TB, 128]

    # lane masks for the packed layout
    lane = jax.lax.broadcasted_iota(jnp.int32, heads.shape, 1)
    is_type = (lane >= _TYPE_LO) & (lane < _TYPE_HI)
    is_prio = (lane >= _PRIO_LO) & (lane < _PRIO_HI)
    is_sig = (lane >= _EFF) & (lane <= _SUC)
    is_tanh = (lane >= _GF_LO) & (lane < _GF_HI)

    def masked_softmax(mask):
        z = jnp.where(mask, heads, -jnp.inf)
        m = jnp.max(z, axis=-1, keepdims=True)
        e = jnp.where(mask, jnp.exp(heads - m), 0.0)
        s = jnp.sum(e, axis=-1, keepdims=True)
        return e * pl.reciprocal(s, approx=True)

    p_type = masked_softmax(is_type)
    p_prio = masked_softmax(is_prio)
    sig = jnp.clip(pl.reciprocal(1.0 + jnp.exp(-heads), approx=True), 0.0, 1.0)
    th = jnp.tanh(heads)

    # Build the full 128-lane result in-register, then ONE unmasked store.
    result = jnp.where(is_type, p_type, 0.0)
    result = jnp.where(is_prio, p_prio, result)
    result = jnp.where(is_sig, sig, result)
    result = jnp.where(is_tanh, th, result)
    out_ref[...] = result.astype(out_ref.dtype)


def init_params(key):
    """Deterministic PyTorch-style init: U(-1/sqrt(fan_in), 1/sqrt(fan_in)).
    Weights returned already transposed to [in, out], biases as [1, out]."""
    params = {}
    dims = [STATE_DIM] + list(HIDDEN_DIMS)
    names = []
    for i in range(len(HIDDEN_DIMS)):
        names.append((f"fe{i}", dims[i], dims[i + 1]))
    feat_dim = HIDDEN_DIMS[-1]
    names += [("type", feat_dim, N_GOAL_TYPES),
              ("prio", feat_dim, N_PRIORITIES),
              ("effort", feat_dim, 1),
              ("value", feat_dim, 1),
              ("succ", feat_dim, 1),
              ("goal", feat_dim, GOAL_DIM)]
    keys = jax.random.split(key, 2 * len(names))
    for idx, (name, fan_in, fan_out) in enumerate(names):
        k = 1.0 / jnp.sqrt(jnp.float32(fan_in))
        w = jax.random.uniform(keys[2 * idx], (fan_in, fan_out),
                               jnp.float32, minval=-k, maxval=k)
        b = jax.random.uniform(keys[2 * idx + 1], (1, fan_out),
                               jnp.float32, minval=-k, maxval=k)
        params[name] = (w, b)
    return params


def pack_params(params):
    """One-time packing: fuse the 6 heads into one [64, 128] matrix (only the
    head-output N is zero-padded to a full lane width; K dims stay unpadded),
    cast weights to bf16 (biases stay f32 -- added to the f32 accumulator)."""
    w1, b1 = params["fe0"]     # [100, 256]
    w2, b2 = params["fe1"]     # [256, 128]
    w3, b3 = params["fe2"]     # [128,  64]

    wh = jnp.concatenate([params["type"][0], params["prio"][0],
                          params["effort"][0], params["value"][0],
                          params["succ"][0], params["goal"][0]], axis=1)   # [64, 68]
    bh = jnp.concatenate([params["type"][1], params["prio"][1],
                          params["effort"][1], params["value"][1],
                          params["succ"][1], params["goal"][1]], axis=1)   # [1, 68]
    wh = jnp.pad(wh, ((0, 0), (0, HEAD_PAD - wh.shape[1]))).astype(jnp.bfloat16)
    bh = jnp.pad(bh, ((0, 0), (0, HEAD_PAD - bh.shape[1])))

    return dict(w1=w1.astype(jnp.bfloat16), b1=b1,
                w2=w2.astype(jnp.bfloat16), b2=b2,
                w3=w3.astype(jnp.bfloat16), b3=b3,
                wh=wh, bh=bh)


def goal_generation_forward(state, packed, return_packed=False):
    """state: [B, STATE_DIM] float32 -> dict of head outputs (or the packed
    [B, 128] bf16 slab if return_packed=True, avoiding per-head slice passes)."""
    B = state.shape[0]
    Bp = _round_up(B, 8)
    if Bp <= 128:
        TB = Bp                                  # single tile, tiny batch
    else:
        # Big tiles amortize grid overhead and fill the 256-wide MXU, but keep
        # >= 2 grid steps so v7x can shard the parallel axis over both TCs.
        TB = min(512, _round_up(-(-Bp // 2), 128))
        Bp = _round_up(Bp, TB)
    x = state if Bp == B else jnp.pad(state, ((0, Bp - B), (0, 0)))

    def resident(arr):                           # weights stay put across the grid
        return pl.BlockSpec(arr.shape, lambda i: (0, 0))

    out = pl.pallas_call(
        _goal_gen_kernel,
        out_shape=jax.ShapeDtypeStruct((Bp, HEAD_PAD), jnp.bfloat16),
        grid=(Bp // TB,),
        in_specs=[pl.BlockSpec((TB, STATE_DIM), lambda i: (i, 0)),
                  resident(packed["w1"]), resident(packed["b1"]),
                  resident(packed["w2"]), resident(packed["b2"]),
                  resident(packed["w3"]), resident(packed["b3"]),
                  resident(packed["wh"]), resident(packed["bh"])],
        out_specs=pl.BlockSpec((TB, HEAD_PAD), lambda i: (i, 0)),
        compiler_params=pltpu.CompilerParams(
            dimension_semantics=("parallel",),
            vmem_limit_bytes=32 << 20),
    )(x, packed["w1"], packed["b1"], packed["w2"], packed["b2"],
      packed["w3"], packed["b3"], packed["wh"], packed["bh"])

    out = out[:B]
    if return_packed:
        return out                               # lane layout given by _*_LO/_HI
    return {
        "goal_type_probs": out[:, _TYPE_LO:_TYPE_HI].astype(jnp.float32),
        "priority_probs": out[:, _PRIO_LO:_PRIO_HI].astype(jnp.float32),
        "estimated_effort": out[:, _EFF:_EFF + 1].astype(jnp.float32),
        "expected_value": out[:, _VAL:_VAL + 1].astype(jnp.float32),
        "success_probability": out[:, _SUC:_SUC + 1].astype(jnp.float32),
        "goal_features": out[:, _GF_LO:_GF_HI].astype(jnp.float32),
    }


def _reference_forward(state, params):
    """Pure-JAX f32 reference of the PyTorch module (eval mode)."""
    h = state
    for name in ("fe0", "fe1", "fe2"):
        w, b = params[name]
        h = jnp.maximum(h @ w + b, 0.0)

    def head(name):
        w, b = params[name]
        return h @ w + b

    return {
        "goal_type_probs": jax.nn.softmax(head("type"), axis=-1),
        "priority_probs": jax.nn.softmax(head("prio"), axis=-1),
        "estimated_effort": jax.nn.sigmoid(head("effort")),
        "expected_value": jax.nn.sigmoid(head("value")),
        "success_probability": jax.nn.sigmoid(head("succ")),
        "goal_features": jnp.tanh(head("goal")),
    }


def _check(out, ref, B):
    assert out["goal_type_probs"].shape == (B, N_GOAL_TYPES)
    assert out["priority_probs"].shape == (B, N_PRIORITIES)
    assert out["estimated_effort"].shape == (B, 1)
    assert out["expected_value"].shape == (B, 1)
    assert out["success_probability"].shape == (B, 1)
    assert out["goal_features"].shape == (B, GOAL_DIM)

    # probabilities / ranges (loosened for bf16 matmul/output + approx reciprocal)
    assert bool(jnp.allclose(jnp.sum(out["goal_type_probs"], axis=-1), 1.0, atol=1e-2))
    assert bool(jnp.allclose(jnp.sum(out["priority_probs"], axis=-1), 1.0, atol=1e-2))
    assert bool(jnp.all((out["estimated_effort"] >= 0) & (out["estimated_effort"] <= 1)))
    assert bool(jnp.all((out["success_probability"] >= 0) & (out["success_probability"] <= 1)))
    assert bool(jnp.all(jnp.abs(out["goal_features"]) <= 1.0))

    for k in ref:
        assert bool(jnp.allclose(out[k], ref[k], atol=5e-2)), k


if __name__ == "__main__":
    key = jax.random.PRNGKey(0)
    pkey, xkey1, xkey2 = jax.random.split(key, 3)

    params = init_params(pkey)
    packed = pack_params(params)

    fwd = jax.jit(lambda s: goal_generation_forward(s, packed))

    # small batch (single-tile path)
    B1 = 8
    state1 = jax.random.normal(xkey1, (B1, STATE_DIM), jnp.float32)
    out1 = fwd(state1)
    jax.block_until_ready(out1)
    _check(out1, _reference_forward(state1, params), B1)

    # larger batch (multi-tile grid + padded-batch path, exercises TB > 128)
    B2 = 384
    state2 = jax.random.normal(xkey2, (B2, STATE_DIM), jnp.float32)
    out2 = fwd(state2)
    jax.block_until_ready(out2)
    _check(out2, _reference_forward(state2, params), B2)

    print("KERNEL_OK")
</pallas_src>

<mosaic_0001>
module attributes {stable_mosaic.version = 11 : i64} {
  func.func @_goal_gen_kernel(%arg0: i32, %arg1: memref<8x100xf32, #tpu.memory_space<vmem>>, %arg2: memref<100x256xbf16, #tpu.memory_space<vmem>>, %arg3: memref<1x256xf32, #tpu.memory_space<vmem>>, %arg4: memref<256x128xbf16, #tpu.memory_space<vmem>>, %arg5: memref<1x128xf32, #tpu.memory_space<vmem>>, %arg6: memref<128x64xbf16, #tpu.memory_space<vmem>>, %arg7: memref<1x64xf32, #tpu.memory_space<vmem>>, %arg8: memref<64x128xbf16, #tpu.memory_space<vmem>>, %arg9: memref<1x128xf32, #tpu.memory_space<vmem>>, %arg10: memref<8x128xbf16, #tpu.memory_space<vmem>>) attributes {dimension_semantics = [#tpu.dimension_semantics<parallel>], iteration_bounds = array<i64: 1>, scalar_prefetch = 0 : i64, scratch_operands = 0 : i64, tpu.core_type = #tpu.core_type<tc>, window_params = [{transform_indices = @transform_0, window_bounds = array<i64: 8, 100>}, {pipeline_mode = #tpu.pipeline_mode<synchronous>, transform_indices = @transform_1, window_bounds = array<i64: 100, 256>}, {pipeline_mode = #tpu.pipeline_mode<synchronous>, transform_indices = @transform_2, window_bounds = array<i64: 1, 256>}, {pipeline_mode = #tpu.pipeline_mode<synchronous>, transform_indices = @transform_3, window_bounds = array<i64: 256, 128>}, {pipeline_mode = #tpu.pipeline_mode<synchronous>, transform_indices = @transform_4, window_bounds = array<i64: 1, 128>}, {pipeline_mode = #tpu.pipeline_mode<synchronous>, transform_indices = @transform_5, window_bounds = array<i64: 128, 64>}, {pipeline_mode = #tpu.pipeline_mode<synchronous>, transform_indices = @transform_6, window_bounds = array<i64: 1, 64>}, {pipeline_mode = #tpu.pipeline_mode<synchronous>, transform_indices = @transform_7, window_bounds = array<i64: 64, 128>}, {pipeline_mode = #tpu.pipeline_mode<synchronous>, transform_indices = @transform_8, window_bounds = array<i64: 1, 128>}, {transform_indices = @transform_9, window_bounds = array<i64: 8, 128>}]} {
    %c0 = arith.constant 0 : index
    %c0_0 = arith.constant 0 : index
    %0 = vector.load %arg1[%c0, %c0_0] : memref<8x100xf32, #tpu.memory_space<vmem>>, vector<8x100xf32>
    %1 = arith.truncf %0 : vector<8x100xf32> to vector<8x100xbf16>
    %c0_1 = arith.constant 0 : index
    %c0_2 = arith.constant 0 : index
    %2 = vector.load %arg2[%c0_1, %c0_2] : memref<100x256xbf16, #tpu.memory_space<vmem>>, vector<100x256xbf16>
    %cst = arith.constant dense<0.000000e+00> : vector<8x256xf32>
    %3 = tpu.matmul %1, %2, %cst {dimension_numbers = #tpu.dot_dimension_numbers<[1], [0], [0], [1], [0, 0, 1, 1], [], []>} : vector<8x100xbf16>, vector<100x256xbf16>, vector<8x256xf32> -> vector<8x256xf32>
    %c0_3 = arith.constant 0 : index
    %c0_4 = arith.constant 0 : index
    %4 = vector.load %arg3[%c0_3, %c0_4] : memref<1x256xf32, #tpu.memory_space<vmem>>, vector<1x256xf32>
    %5 = vector.broadcast %4 : vector<1x256xf32> to vector<8x256xf32>
    %6 = arith.addf %3, %5 : vector<8x256xf32>
    %cst_5 = arith.constant 0.000000e+00 : f32
    %7 = vector.broadcast %cst_5 : f32 to vector<8x256xf32>
    %8 = arith.maximumf %6, %7 : vector<8x256xf32>
    %9 = arith.truncf %8 : vector<8x256xf32> to vector<8x256xbf16>
    %c0_6 = arith.constant 0 : index
    %c0_7 = arith.constant 0 : index
    %10 = vector.load %arg4[%c0_6, %c0_7] : memref<256x128xbf16, #tpu.memory_space<vmem>>, vector<256x128xbf16>
    %cst_8 = arith.constant dense<0.000000e+00> : vector<8x128xf32>
    %11 = tpu.matmul %9, %10, %cst_8 {dimension_numbers = #tpu.dot_dimension_numbers<[1], [0], [0], [1], [0, 0, 1, 1], [], []>} : vector<8x256xbf16>, vector<256x128xbf16>, vector<8x128xf32> -> vector<8x128xf32>
    %c0_9 = arith.constant 0 : index
    %c0_10 = arith.constant 0 : index
    %12 = vector.load %arg5[%c0_9, %c0_10] : memref<1x128xf32, #tpu.memory_space<vmem>>, vector<1x128xf32>
    %13 = vector.broadcast %12 : vector<1x128xf32> to vector<8x128xf32>
    %14 = arith.addf %11, %13 : vector<8x128xf32>
    %cst_11 = arith.constant 0.000000e+00 : f32
    %15 = vector.broadcast %cst_11 : f32 to vector<8x128xf32>
    %16 = arith.maximumf %14, %15 : vector<8x128xf32>
    %17 = arith.truncf %16 : vector<8x128xf32> to vector<8x128xbf16>
    %c0_12 = arith.constant 0 : index
    %c0_13 = arith.constant 0 : index
    %18 = vector.load %arg6[%c0_12, %c0_13] : memref<128x64xbf16, #tpu.memory_space<vmem>>, vector<128x64xbf16>
    %cst_14 = arith.constant dense<0.000000e+00> : vector<8x64xf32>
    %19 = tpu.matmul %17, %18, %cst_14 {dimension_numbers = #tpu.dot_dimension_numbers<[1], [0], [0], [1], [0, 0, 1, 1], [], []>} : vector<8x128xbf16>, vector<128x64xbf16>, vector<8x64xf32> -> vector<8x64xf32>
    %c0_15 = arith.constant 0 : index
    %c0_16 = arith.constant 0 : index
    %20 = vector.load %arg7[%c0_15, %c0_16] : memref<1x64xf32, #tpu.memory_space<vmem>>, vector<1x64xf32>
    %21 = vector.broadcast %20 : vector<1x64xf32> to vector<8x64xf32>
    %22 = arith.addf %19, %21 : vector<8x64xf32>
    %cst_17 = arith.constant 0.000000e+00 : f32
    %23 = vector.broadcast %cst_17 : f32 to vector<8x64xf32>
    %24 = arith.maximumf %22, %23 : vector<8x64xf32>
    %25 = arith.truncf %24 : vector<8x64xf32> to vector<8x64xbf16>
    %c0_18 = arith.constant 0 : index
    %c0_19 = arith.constant 0 : index
    %26 = vector.load %arg8[%c0_18, %c0_19] : memref<64x128xbf16, #tpu.memory_space<vmem>>, vector<64x128xbf16>
    %cst_20 = arith.constant dense<0.000000e+00> : vector<8x128xf32>
    %27 = tpu.matmul %25, %26, %cst_20 {dimension_numbers = #tpu.dot_dimension_numbers<[1], [0], [0], [1], [0, 0, 1, 1], [], []>} : vector<8x64xbf16>, vector<64x128xbf16>, vector<8x128xf32> -> vector<8x128xf32>
    %c0_21 = arith.constant 0 : index
    %c0_22 = arith.constant 0 : index
    %28 = vector.load %arg9[%c0_21, %c0_22] : memref<1x128xf32, #tpu.memory_space<vmem>>, vector<1x128xf32>
    %29 = vector.broadcast %28 : vector<1x128xf32> to vector<8x128xf32>
    %30 = arith.addf %27, %29 : vector<8x128xf32>
    %31 = tpu.iota {dimensions = array<i32: 1>} : vector<8x128xi32>
    %c0_i32 = arith.constant 0 : i32
    %32 = vector.broadcast %c0_i32 : i32 to vector<8x128xi32>
    %33 = arith.cmpi sge, %31, %32 : vector<8x128xi32>
    %c10_i32 = arith.constant 10 : i32
    %34 = vector.broadcast %c10_i32 : i32 to vector<8x128xi32>
    %35 = arith.cmpi slt, %31, %34 : vector<8x128xi32>
    %36 = arith.andi %33, %35 : vector<8x128xi1>
    %c10_i32_23 = arith.constant 10 : i32
    %37 = vector.broadcast %c10_i32_23 : i32 to vector<8x128xi32>
    %38 = arith.cmpi sge, %31, %37 : vector<8x128xi32>
    %c15_i32 = arith.constant 15 : i32
    %39 = vector.broadcast %c15_i32 : i32 to vector<8x128xi32>
    %40 = arith.cmpi slt, %31, %39 : vector<8x128xi32>
    %41 = arith.andi %38, %40 : vector<8x128xi1>
    %c15_i32_24 = arith.constant 15 : i32
    %42 = vector.broadcast %c15_i32_24 : i32 to vector<8x128xi32>
    %43 = arith.cmpi sge, %31, %42 : vector<8x128xi32>
    %c17_i32 = arith.constant 17 : i32
    %44 = vector.broadcast %c17_i32 : i32 to vector<8x128xi32>
    %45 = arith.cmpi sle, %31, %44 : vector<8x128xi32>
    %46 = arith.andi %43, %45 : vector<8x128xi1>
    %c18_i32 = arith.constant 18 : i32
    %47 = vector.broadcast %c18_i32 : i32 to vector<8x128xi32>
    %48 = arith.cmpi sge, %31, %47 : vector<8x128xi32>
    %c68_i32 = arith.constant 68 : i32
    %49 = vector.broadcast %c68_i32 : i32 to vector<8x128xi32>
    %50 = arith.cmpi slt, %31, %49 : vector<8x128xi32>
    %51 = arith.andi %48, %50 : vector<8x128xi1>
    %cst_25 = arith.constant 0xFF800000 : f32
    %52 = vector.broadcast %cst_25 : f32 to vector<8x128xf32>
    %53 = arith.select %36, %30, %52 : vector<8x128xi1>, vector<8x128xf32>
    %cst_26 = arith.constant dense<0xFF800000> : vector<8xf32>
    %54 = vector.multi_reduction <maximumf>, %53, %cst_26 [1] : vector<8x128xf32> to vector<8xf32>
    %55 = vector.shape_cast %54 : vector<8xf32> to vector<8x1xf32>
    %56 = vector.broadcast %55 : vector<8x1xf32> to vector<8x128xf32>
    %57 = arith.subf %30, %56 : vector<8x128xf32>
    %58 = math.exp %57 : vector<8x128xf32>
    %cst_27 = arith.constant 0.000000e+00 : f32
    %59 = vector.broadcast %cst_27 : f32 to vector<8x128xf32>
    %60 = arith.select %36, %58, %59 : vector<8x128xi1>, vector<8x128xf32>
    %cst_28 = arith.constant dense<0.000000e+00> : vector<8xf32>
    %61 = vector.multi_reduction <add>, %60, %cst_28 [1] : vector<8x128xf32> to vector<8xf32>
    %62 = vector.shape_cast %61 : vector<8xf32> to vector<8x1xf32>
    %63 = tpu.reciprocal %62 {approx = true} : vector<8x1xf32> -> vector<8x1xf32>
    %64 = vector.broadcast %63 : vector<8x1xf32> to vector<8x128xf32>
    %65 = arith.mulf %60, %64 : vector<8x128xf32>
    %cst_29 = arith.constant 0xFF800000 : f32
    %66 = vector.broadcast %cst_29 : f32 to vector<8x128xf32>
    %67 = arith.select %41, %30, %66 : vector<8x128xi1>, vector<8x128xf32>
    %cst_30 = arith.constant dense<0xFF800000> : vector<8xf32>
    %68 = vector.multi_reduction <maximumf>, %67, %cst_30 [1] : vector<8x128xf32> to vector<8xf32>
    %69 = vector.shape_cast %68 : vector<8xf32> to vector<8x1xf32>
    %70 = vector.broadcast %69 : vector<8x1xf32> to vector<8x128xf32>
    %71 = arith.subf %30, %70 : vector<8x128xf32>
    %72 = math.exp %71 : vector<8x128xf32>
    %cst_31 = arith.constant 0.000000e+00 : f32
    %73 = vector.broadcast %cst_31 : f32 to vector<8x128xf32>
    %74 = arith.select %41, %72, %73 : vector<8x128xi1>, vector<8x128xf32>
    %cst_32 = arith.constant dense<0.000000e+00> : vector<8xf32>
    %75 = vector.multi_reduction <add>, %74, %cst_32 [1] : vector<8x128xf32> to vector<8xf32>
    %76 = vector.shape_cast %75 : vector<8xf32> to vector<8x1xf32>
    %77 = tpu.reciprocal %76 {approx = true} : vector<8x1xf32> -> vector<8x1xf32>
    %78 = vector.broadcast %77 : vector<8x1xf32> to vector<8x128xf32>
    %79 = arith.mulf %74, %78 : vector<8x128xf32>
    %cst_33 = arith.constant 0.000000e+00 : f32
    %80 = vector.broadcast %cst_33 : f32 to vector<8x128xf32>
    %81 = arith.subf %80, %30 : vector<8x128xf32>
    %82 = math.exp %81 : vector<8x128xf32>
    %cst_34 = arith.constant 1.000000e+00 : f32
    %83 = vector.broadcast %cst_34 : f32 to vector<8x128xf32>
    %84 = arith.addf %83, %82 : vector<8x128xf32>
    %85 = tpu.reciprocal %84 {approx = true} : vector<8x128xf32> -> vector<8x128xf32>
    %cst_35 = arith.constant 0.000000e+00 : f32
    %cst_36 = arith.constant 1.000000e+00 : f32
    %86 = vector.broadcast %cst_35 : f32 to vector<8x128xf32>
    %87 = arith.maximumf %86, %85 : vector<8x128xf32>
    %88 = vector.broadcast %cst_36 : f32 to vector<8x128xf32>
    %89 = arith.minimumf %88, %87 : vector<8x128xf32>
    %90 = math.tanh %30 : vector<8x128xf32>
    %cst_37 = arith.constant 0.000000e+00 : f32
    %91 = vector.broadcast %cst_37 : f32 to vector<8x128xf32>
    %92 = arith.select %36, %65, %91 : vector<8x128xi1>, vector<8x128xf32>
    %93 = arith.select %41, %79, %92 : vector<8x128xi1>, vector<8x128xf32>
    %94 = arith.select %46, %89, %93 : vector<8x128xi1>, vector<8x128xf32>
    %95 = arith.select %51, %90, %94 : vector<8x128xi1>, vector<8x128xf32>
    %96 = arith.truncf %95 : vector<8x128xf32> to vector<8x128xbf16>
    %c0_38 = arith.constant 0 : index
    %c0_39 = arith.constant 0 : index
    %97 = vector.load %arg10[%c0_38, %c0_39] : memref<8x128xbf16, #tpu.memory_space<vmem>>, vector<8x128xbf16>
    tpu.vector_store %arg10[%c0_38, %c0_39], %96 {strides = array<i32>} : memref<8x128xbf16, #tpu.memory_space<vmem>>, vector<8x128xbf16>,
    return
  }
  func.func @transform_0(%arg0: i32) -> (i32, i32) {
    %c0_i32 = arith.constant 0 : i32
    %c0_i32_0 = arith.constant 0 : i32
    return %arg0, %c0_i32 : i32, i32
  }
  func.func @transform_1(%arg0: i32) -> (i32, i32) {
    %c0_i32 = arith.constant 0 : i32
    %c0_i32_0 = arith.constant 0 : i32
    %c0_i32_1 = arith.constant 0 : i32
    return %c0_i32, %c0_i32_0 : i32, i32
  }
  func.func @transform_2(%arg0: i32) -> (i32, i32) {
    %c0_i32 = arith.constant 0 : i32
    %c0_i32_0 = arith.constant 0 : i32
    %c0_i32_1 = arith.constant 0 : i32
    return %c0_i32, %c0_i32_0 : i32, i32
  }
  func.func @transform_3(%arg0: i32) -> (i32, i32) {
    %c0_i32 = arith.constant 0 : i32
    %c0_i32_0 = arith.constant 0 : i32
    %c0_i32_1 = arith.constant 0 : i32
    return %c0_i32, %c0_i32_0 : i32, i32
  }
  func.func @transform_4(%arg0: i32) -> (i32, i32) {
    %c0_i32 = arith.constant 0 : i32
    %c0_i32_0 = arith.constant 0 : i32
    %c0_i32_1 = arith.constant 0 : i32
    return %c0_i32, %c0_i32_0 : i32, i32
  }
  func.func @transform_5(%arg0: i32) -> (i32, i32) {
    %c0_i32 = arith.constant 0 : i32
    %c0_i32_0 = arith.constant 0 : i32
    %c0_i32_1 = arith.constant 0 : i32
    return %c0_i32, %c0_i32_0 : i32, i32
  }
  func.func @transform_6(%arg0: i32) -> (i32, i32) {
    %c0_i32 = arith.constant 0 : i32
    %c0_i32_0 = arith.constant 0 : i32
    %c0_i32_1 = arith.constant 0 : i32
    return %c0_i32, %c0_i32_0 : i32, i32
  }
  func.func @transform_7(%arg0: i32) -> (i32, i32) {
    %c0_i32 = arith.constant 0 : i32
    %c0_i32_0 = arith.constant 0 : i32
    %c0_i32_1 = arith.constant 0 : i32
    return %c0_i32, %c0_i32_0 : i32, i32
  }
  func.func @transform_8(%arg0: i32) -> (i32, i32) {
    %c0_i32 = arith.constant 0 : i32
    %c0_i32_0 = arith.constant 0 : i32
    %c0_i32_1 = arith.constant 0 : i32
    return %c0_i32, %c0_i32_0 : i32, i32
  }
  func.func @transform_9(%arg0: i32) -> (i32, i32) {
    %c0_i32 = arith.constant 0 : i32
    %c0_i32_0 = arith.constant 0 : i32
    return %arg0, %c0_i32 : i32, i32
  }
}

</mosaic_0001>

<llo_original>
// kernel: _lambda_.1
$region0: #{_lambda_.1}
  #allocation0 [shape = 'u32[]', space=smem, size = 0x4, offset = 0x4, fixed_abs, tag = 'smem constant byte address 0x4 - core index']
  #allocation1 [shape = 'u32[144,128]{1,0:T(1,128)}', space=vmem, size = 0x12000, scoped, tag = 'internal scratch']
  %s0 = inlined_call_operand.hbm [shape: f32[8,100], index: 0, kind: input, shape index: {}]
  %s1 = inlined_call_operand.hbm [shape: bf16[100,256], index: 1, kind: input, shape index: {}]
  %s2 = inlined_call_operand.vmem [shape: f32[1,256], index: 2, kind: input, shape index: {}]
  %s3 = inlined_call_operand.hbm [shape: bf16[256,128], index: 3, kind: input, shape index: {}]
  %s4 = inlined_call_operand.hbm [shape: f32[1,128], index: 4, kind: input, shape index: {}]
  %s5 = inlined_call_operand.hbm [shape: bf16[128,64], index: 5, kind: input, shape index: {}]
  %s6 = inlined_call_operand.hbm [shape: f32[1,64], index: 6, kind: input, shape index: {}]
  %s7 = inlined_call_operand.vmem [shape: bf16[64,128], index: 7, kind: input, shape index: {}]
  %s8 = inlined_call_operand.hbm [shape: f32[1,128], index: 8, kind: input, shape index: {}]
  %s9 = inlined_call_operand.vmem [shape: bf16[8,128], index: 9, kind: output, shape index: {}]
  %s10 = sld [smem:[#allocation0]]
  $region74: #{_lambda_.1} parent=0
    _
  %s12 = ssub.s32 1, %s10
  %s13 = scalar_select 0, %s12, %s10
  $region1: #{_lambda_.1} parent=0
    #allocation2 [shape = 'u8[4096]{0}', space=vmem, size = 0x1000, scoped, tag = 'input window, operand 0, single buffered']
    #allocation3 [shape = 's32[1]{0}', space=sflag, size = 0x4, scoped, tag = 'scoped memory for _lambda_.1']
    #allocation4 [shape = 'u8[53248]{0}', space=vmem, size = 0xd000, scoped, tag = 'input window, operand 1, single buffered']
    #allocation5 [shape = 's32[1]{0}', space=sflag, size = 0x4, scoped, tag = 'scoped memory for _lambda_.1']
    #allocation6 [shape = 'u8[65536]{0}', space=vmem, size = 0x10000, scoped, tag = 'input window, operand 3, single buffered']
    #allocation7 [shape = 'u8[512]{0}', space=vmem, size = 0x400, scoped, tag = 'input window, operand 4, single buffered']
    #allocation8 [shape = 's32[1]{0}', space=sflag, size = 0x4, scoped, tag = 'scoped memory for _lambda_.1']
    #allocation9 [shape = 'u8[32768]{0}', space=vmem, size = 0x8000, scoped, tag = 'input window, operand 5, single buffered']
    #allocation10 [shape = 'u8[512]{0}', space=vmem, size = 0x400, scoped, tag = 'input window, operand 6, single buffered']
    #allocation11 [shape = 's32[1]{0}', space=sflag, size = 0x4, scoped, tag = 'scoped memory for _lambda_.1']
    #allocation12 [shape = 'u8[512]{0}', space=vmem, size = 0x400, scoped, tag = 'input window, operand 8, single buffered']
    %14 = vsyncpa [#allocation3], 0
    %15 = vsyncpa [#allocation5], 0
    %16 = vsyncpa [#allocation8], 0
    %17 = vsyncpa [#allocation11], 0
    // Predicated region
    $region2: #{_lambda_.1} parent=1 // pred_check
      _
    $region3: #{_lambda_.1} parent=1 // pred_check_branch
      %19 = sbr.rel (0) target = $region5
    $region4: #{_lambda_.1} parent=1 // pred_region
      %s21 = ssub.s32 128, 128
      %22 = vsyncadd [#allocation3], %s21
      %s24 = sshll.u32 [#allocation2], 4
      %s25 = int_to_ptr.vmem [resolvable:$true] %s24
      %27 = dma.hbm_to_vmem [thread:$0]  %s0, 128, %s25, [#allocation3]
    $region5: #{_lambda_.1} parent=1 // pred_fallthru
      _
    // Predicated region
    $region6: #{_lambda_.1} parent=1 // pred_check
      _
    $region7: #{_lambda_.1} parent=1 // pred_check_branch
      %29 = sbr.rel (0) target = $region9
    $region8: #{_lambda_.1} parent=1 // pred_region
      %s31 = ssub.s32 1664, 1664
      %32 = vsyncadd [#allocation5], %s31
      %s33 = sshll.u32 [#allocation4], 4
      %s34 = int_to_ptr.vmem [resolvable:$true] %s33
      %39 = dma.hbm_to_vmem [thread:$0]  %s1, 1664, %s34, [#allocation5], 128, 128, 8
    $region9: #{_lambda_.1} parent=1 // pred_fallthru
      _
    // Predicated region
    $region10: #{_lambda_.1} parent=1 // pred_check
      _
    $region11: #{_lambda_.1} parent=1 // pred_check_branch
      %41 = sbr.rel (0) target = $region13
    $region12: #{_lambda_.1} parent=1 // pred_region
      _
    $region13: #{_lambda_.1} parent=1 // pred_fallthru
      _
    // Predicated region
    $region14: #{_lambda_.1} parent=1 // pred_check
      _
    $region15: #{_lambda_.1} parent=1 // pred_check_branch
      %43 = sbr.rel (0) target = $region17
    $region16: #{_lambda_.1} parent=1 // pred_region
      %s45 = ssub.s32 2048, 2048
      %46 = vsyncadd [#allocation5], %s45
      %s47 = sshll.u32 [#allocation6], 4
      %s48 = int_to_ptr.vmem [resolvable:$true] %s47
      %53 = dma.hbm_to_vmem [thread:$0]  %s3, 2048, %s48, [#allocation5], 64, 64, 4
    $region17: #{_lambda_.1} parent=1 // pred_fallthru
      _
    // Predicated region
    $region18: #{_lambda_.1} parent=1 // pred_check
      _
    $region19: #{_lambda_.1} parent=1 // pred_check_branch
      %55 = sbr.rel (0) target = $region21
    $region20: #{_lambda_.1} parent=1 // pred_region
      %s57 = ssub.s32 16, 16
      %58 = vsyncadd [#allocation8], %s57
      %s60 = sshll.u32 [#allocation7], 4
      %s61 = int_to_ptr.vmem [resolvable:$true] %s60
      %63 = dma.hbm_to_vmem [thread:$0]  %s4, 16, %s61, [#allocation8]
    $region21: #{_lambda_.1} parent=1 // pred_fallthru
      _
    // Predicated region
    $region22: #{_lambda_.1} parent=1 // pred_check
      _
    $region23: #{_lambda_.1} parent=1 // pred_check_branch
      %65 = sbr.rel (0) target = $region25
    $region24: #{_lambda_.1} parent=1 // pred_region
      %s67 = ssub.s32 1024, 1024
      %68 = vsyncadd [#allocation8], %s67
      %s69 = sshll.u32 [#allocation9], 4
      %s70 = int_to_ptr.vmem [resolvable:$true] %s69
      %75 = dma.hbm_to_vmem [thread:$0]  %s5, 1024, %s70, [#allocation8], 64, 64, 4
    $region25: #{_lambda_.1} parent=1 // pred_fallthru
      _
    // Predicated region
    $region26: #{_lambda_.1} parent=1 // pred_check
      _
    $region27: #{_lambda_.1} parent=1 // pred_check_branch
      %77 = sbr.rel (0) target = $region29
    $region28: #{_lambda_.1} parent=1 // pred_region
      %s79 = ssub.s32 16, 16
      %80 = vsyncadd [#allocation11], %s79
      %s82 = sshll.u32 [#allocation10], 4
      %s83 = int_to_ptr.vmem [resolvable:$true] %s82
      %85 = dma.hbm_to_vmem [thread:$0]  %s6, 16, %s83, [#allocation11]
    $region29: #{_lambda_.1} parent=1 // pred_fallthru
      _
    // Predicated region
    $region30: #{_lambda_.1} parent=1 // pred_check
      _
    $region31: #{_lambda_.1} parent=1 // pred_check_branch
      %87 = sbr.rel (0) target = $region33
    $region32: #{_lambda_.1} parent=1 // pred_region
      _
    $region33: #{_lambda_.1} parent=1 // pred_fallthru
      _
    // Predicated region
    $region34: #{_lambda_.1} parent=1 // pred_check
      _
    $region35: #{_lambda_.1} parent=1 // pred_check_branch
      %89 = sbr.rel (0) target = $region37
    $region36: #{_lambda_.1} parent=1 // pred_region
      %s91 = ssub.s32 16, 16
      %92 = vsyncadd [#allocation11], %s91
      %s94 = sshll.u32 [#allocation12], 4
      %s95 = int_to_ptr.vmem [resolvable:$true] %s94
      %97 = dma.hbm_to_vmem [thread:$0]  %s8, 16, %s95, [#allocation11]
    $region37: #{_lambda_.1} parent=1 // pred_fallthru
      _
    // Predicated region
    $region38: #{_lambda_.1} parent=1 // pred_check
      _
    $region39: #{_lambda_.1} parent=1 // pred_check_branch
      %99 = sbr.rel (0) target = $region41
    $region40: #{_lambda_.1} parent=1 // pred_region
      %100 = dma.done [#allocation3], 128
    $region41: #{_lambda_.1} parent=1 // pred_fallthru
      _
    // Predicated region
    $region42: #{_lambda_.1} parent=1 // pred_check
      _
    $region43: #{_lambda_.1} parent=1 // pred_check_branch
      %102 = sbr.rel (0) target = $region45
    $region44: #{_lambda_.1} parent=1 // pred_region
      %103 = dma.done [#allocation5], 1664
    $region45: #{_lambda_.1} parent=1 // pred_fallthru
      _
    // Predicated region
    $region46: #{_lambda_.1} parent=1 // pred_check
      _
    $region47: #{_lambda_.1} parent=1 // pred_check_branch
      %105 = sbr.rel (0) target = $region49
    $region48: #{_lambda_.1} parent=1 // pred_region
      %106 = dma.done [#allocation5], 2048
    $region49: #{_lambda_.1} parent=1 // pred_fallthru
      _
    // Predicated region
    $region50: #{_lambda_.1} parent=1 // pred_check
      _
    $region51: #{_lambda_.1} parent=1 // pred_check_branch
      %108 = sbr.rel (0) target = $region53
    $region52: #{_lambda_.1} parent=1 // pred_region
      %109 = dma.done [#allocation8], 16
    $region53: #{_lambda_.1} parent=1 // pred_fallthru
      _
    // Predicated region
    $region54: #{_lambda_.1} parent=1 // pred_check
      _
    $region55: #{_lambda_.1} parent=1 // pred_check_branch
      %111 = sbr.rel (0) target = $region57
    $region56: #{_lambda_.1} parent=1 // pred_region
      %112 = dma.done [#allocation8], 1024
    $region57: #{_lambda_.1} parent=1 // pred_fallthru
      _
    // Predicated region
    $region58: #{_lambda_.1} parent=1 // pred_check
      _
    $region59: #{_lambda_.1} parent=1 // pred_check_branch
      %114 = sbr.rel (0) target = $region61
    $region60: #{_lambda_.1} parent=1 // pred_region
      %115 = dma.done [#allocation11], 16
    $region61: #{_lambda_.1} parent=1 // pred_fallthru
      _
    // Predicated region
    $region62: #{_lambda_.1} parent=1 // pred_check
      _
    $region63: #{_lambda_.1} parent=1 // pred_check_branch
      %117 = sbr.rel (0) target = $region65
    $region64: #{_lambda_.1} parent=1 // pred_region
      %118 = dma.done [#allocation11], 16
    $region65: #{_lambda_.1} parent=1 // pred_fallthru
      _
    %v120 = vld [vmem:[#allocation2] sm:$0xff]
    %v121 = vpack.c.bf16 %v120, %v120
    %v122 = vld [vmem:[#allocation4] sm:$0xff]
    %v123 = vld [vmem:[#allocation4 + $0x8] sm:$0xff]
    %v124 = vld [vmem:[#allocation4 + $0x10] sm:$0xff]
    %v125 = vld [vmem:[#allocation4 + $0x18] sm:$0xff]
    %v126 = vld [vmem:[#allocation4 + $0x20] sm:$0xff]
    %v127 = vld [vmem:[#allocation4 + $0x28] sm:$0xff]
    %v128 = vld [vmem:[#allocation4 + $0x30] sm:$0xff]
    %v129 = vld [vmem:[#allocation4 + $0x38] sm:$0xff]
    %v130 = vld [vmem:[#allocation4 + $0x40] sm:$0xff]
    %v131 = vld [vmem:[#allocation4 + $0x48] sm:$0xff]
    %v132 = vld [vmem:[#allocation4 + $0x50] sm:$0xff]
    %v133 = vld [vmem:[#allocation4 + $0x58] sm:$0xff]
    %v134 = vld [vmem:[#allocation4 + $0x60] sm:$0x33]
    %v135 = vld [vmem:[%s2] sm:$0x3]
    %v137 = vlaneseq
    %v138 = vshrl.u32 %v137, 7
    %v139 = vsub.s32 0, %v138
    %v140 = vrot.slane %v135, %v139
    %v141 = vlaneseq
    %v142 = vshrl.u32 %v141, 7
    %v143 = vsub.s32 1, %v142
    %v144 = vrot.slane %v135, %v143
    %v160 = vunpack.c.l.b16 %v122
    %v161 = vunpack.c.h.b16 %v122
    %v162 = vunpack.c.l.b16 %v123
    %v163 = vunpack.c.h.b16 %v123
    %v164 = vunpack.c.l.b16 %v124
    %v165 = vunpack.c.h.b16 %v124
    %v166 = vunpack.c.l.b16 %v125
    %v167 = vunpack.c.h.b16 %v125
    %v168 = vunpack.c.l.b16 %v126
    %v169 = vunpack.c.h.b16 %v126
    %v170 = vunpack.c.l.b16 %v127
    %v171 = vunpack.c.h.b16 %v127
    %v172 = vunpack.c.l.b16 %v128
    %v173 = vunpack.c.h.b16 %v128
    %v174 = vunpack.c.l.b16 %v129
    %v175 = vunpack.c.h.b16 %v129
    %v176 = vunpack.c.l.b16 %v130
    %v177 = vunpack.c.h.b16 %v130
    %v178 = vunpack.c.l.b16 %v131
    %v179 = vunpack.c.h.b16 %v131
    %v180 = vunpack.c.l.b16 %v132
    %v181 = vunpack.c.h.b16 %v132
    %v182 = vunpack.c.l.b16 %v133
    %v183 = vunpack.c.h.b16 %v133
    %v184 = vunpack.c.l.b16 %v134
    %v185 = vunpack.c.h.b16 %v134
    %v186 = vpack.c.b16 %v162, %v160
    %v187 = vpack.c.b16 %v163, %v161
    %v188 = vpack.c.b16 %v166, %v164
    %v189 = vpack.c.b16 %v167, %v165
    %v190 = vpack.c.b16 %v170, %v168
    %v191 = vpack.c.b16 %v171, %v169
    %v192 = vpack.c.b16 %v174, %v172
    %v193 = vpack.c.b16 %v175, %v173
    %v194 = vpack.c.b16 %v178, %v176
    %v195 = vpack.c.b16 %v179, %v177
    %v196 = vpack.c.b16 %v182, %v180
    %v197 = vpack.c.b16 %v183, %v181
    %v198 = vpack.c.b16 %v184, %v184
    %v199 = vpack.c.b16 %v185, %v185
    %vm212 = vcmask 818176
    %v214 = vsel %vm212, %v121, 0
    %vm216 = vcmask 1041408
    %v218 = vsel %vm216, %v198, 0
    %v221 = vsel %vm216, %v199, 0
    %223 = vmatprep.subr.bf16.mxu0 %v187
    %224 = vmatpush1.bf16.msra.mxu0 %v186
    %225 = vmatprep.subr.bf16.mxu0 %v189
    %226 = vmatpush1.bf16.msra.mxu0 %v188
    %227 = vmatprep.subr.bf16.mxu0 %v191
    %228 = vmatpush1.bf16.msra.mxu0 %v190
    %229 = vmatprep.subr.bf16.mxu0 %v193
    %230 = vmatpush1.bf16.msra.mxu0 %v192
    %231 = vmatprep.subr.bf16.mxu0 %v195
    %232 = vmatpush1.bf16.msra.mxu0 %v194
    %233 = vmatprep.subr.bf16.mxu0 %v197
    %234 = vmatpush1.bf16.msra.mxu0 %v196
    %235 = vmatprep.subr.bf16.mxu0 %v221
    %236 = vmatpush1.bf16.msra.mxu0 %v218
    %237 = vmatprep.subr.bf16.mxu0 0
    %238 = vmatpush1.bf16.msra.mxu0 0
    %239 = vmatprep.subr.bf16.mxu0 0
    %240 = vmatpush1.bf16.msra.mxu0 0
    %241 = vmatprep.subr.bf16.mxu0 0
    %242 = vmatpush1.bf16.msra.mxu0 0
    %243 = vmatprep.subr.bf16.mxu0 0
    %244 = vmatpush1.bf16.msra.mxu0 0
    %245 = vmatprep.subr.bf16.mxu0 0
    %246 = vmatpush1.bf16.msra.mxu0 0
    %247 = vmatprep.subr.bf16.mxu0 0
    %248 = vmatpush1.bf16.msra.mxu0 0
    %249 = vmatprep.subr.bf16.mxu0 0
    %250 = vmatpush1.bf16.msra.mxu0 0
    %251 = vmatprep.subr.bf16.mxu0 0
    %252 = vmatpush1.bf16.msra.mxu0 0
    %253 = vmatprep.subr.bf16.mxu0 0
    %254 = vmatpush1.bf16.msra.mxu0 0
    %255 = vmatprep.mubr.bf16.mxu0 0
    %256 = vmatmul.mubr.bf16.gmra.mrb[0].mxu0 %v214
    %v257 = vpop.f32.mrb[0].mxu0
    %v258 = vadd.f32 %v140, %v257
    %v259 = vpop.f32.mrb[0].mxu0
    %v260 = vadd.f32 %v144, %v259
    %v261 = vpop.f32.mrb[0].mxu0
    %v262 = vpop.f32.mrb[0].mxu0
    %263 = vdwg.mxu0
    %v264 = vmax.f32 %v258, 0.0
    %v265 = vmax.f32 %v260, 0.0
    %v266 = vpack.c.bf16 %v264, %v264
    %v267 = vpack.c.bf16 %v265, %v265
    %v268 = vld [vmem:[#allocation6] sm:$0xf]
    %v269 = vld [vmem:[#allocation6 + $0x4] sm:$0xf]
    %v270 = vld [vmem:[#allocation6 + $0x8] sm:$0xf]
    %v271 = vld [vmem:[#allocation6 + $0xc] sm:$0xf]
    %v272 = vld [vmem:[#allocation6 + $0x10] sm:$0xf]
    %v273 = vld [vmem:[#allocation6 + $0x14] sm:$0xf]
    %v274 = vld [vmem:[#allocation6 + $0x18] sm:$0xf]
    %v275 = vld [vmem:[#allocation6 + $0x1c] sm:$0xf]
    %v276 = vld [vmem:[#allocation6 + $0x20] sm:$0xf]
    %v277 = vld [vmem:[#allocation6 + $0x24] sm:$0xf]
    %v278 = vld [vmem:[#allocation6 + $0x28] sm:$0xf]
    %v279 = vld [vmem:[#allocation6 + $0x2c] sm:$0xf]
    %v280 = vld [vmem:[#allocation6 + $0x30] sm:$0xf]
    %v281 = vld [vmem:[#allocation6 + $0x34] sm:$0xf]
    %v282 = vld [vmem:[#allocation6 + $0x38] sm:$0xf]
    %v283 = vld [vmem:[#allocation6 + $0x3c] sm:$0xf]
    %v284 = vld [vmem:[#allocation6 + $0x40] sm:$0xf]
    %v285 = vld [vmem:[#allocation6 + $0x44] sm:$0xf]
    %v286 = vld [vmem:[#allocation6 + $0x48] sm:$0xf]
    %v287 = vld [vmem:[#allocation6 + $0x4c] sm:$0xf]
    %v288 = vld [vmem:[#allocation6 + $0x50] sm:$0xf]
    %v289 = vld [vmem:[#allocation6 + $0x54] sm:$0xf]
    %v290 = vld [vmem:[#allocation6 + $0x58] sm:$0xf]
    %v291 = vld [vmem:[#allocation6 + $0x5c] sm:$0xf]
    %v292 = vld [vmem:[#allocation6 + $0x60] sm:$0xf]
    %v293 = vld [vmem:[#allocation6 + $0x64] sm:$0xf]
    %v294 = vld [vmem:[#allocation6 + $0x68] sm:$0xf]
    %v295 = vld [vmem:[#allocation6 + $0x6c] sm:$0xf]
    %v296 = vld [vmem:[#allocation6 + $0x70] sm:$0xf]
    %v297 = vld [vmem:[#allocation6 + $0x74] sm:$0xf]
    %v298 = vld [vmem:[#allocation6 + $0x78] sm:$0xf]
    %v299 = vld [vmem:[#allocation6 + $0x7c] sm:$0xf]
    %v300 = vld [vmem:[#allocation7] sm:$0x1]
    %v302 = vlaneseq
    %v303 = vshrl.u32 %v302, 7
    %v304 = vsub.s32 0, %v303
    %v305 = vrot.slane %v300, %v304
    %v339 = vunpack.c.l.b16 %v268
    %v340 = vunpack.c.l.b16 %v269
    %v341 = vunpack.c.l.b16 %v270
    %v342 = vunpack.c.l.b16 %v271
    %v343 = vunpack.c.l.b16 %v272
    %v344 = vunpack.c.l.b16 %v273
    %v345 = vunpack.c.l.b16 %v274
    %v346 = vunpack.c.l.b16 %v275
    %v347 = vunpack.c.l.b16 %v276
    %v348 = vunpack.c.l.b16 %v277
    %v349 = vunpack.c.l.b16 %v278
    %v350 = vunpack.c.l.b16 %v279
    %v351 = vunpack.c.l.b16 %v280
    %v352 = vunpack.c.l.b16 %v281
    %v353 = vunpack.c.l.b16 %v282
    %v354 = vunpack.c.l.b16 %v283
    %v355 = vunpack.c.l.b16 %v284
    %v356 = vunpack.c.l.b16 %v285
    %v357 = vunpack.c.l.b16 %v286
    %v358 = vunpack.c.l.b16 %v287
    %v359 = vunpack.c.l.b16 %v288
    %v360 = vunpack.c.l.b16 %v289
    %v361 = vunpack.c.l.b16 %v290
    %v362 = vunpack.c.l.b16 %v291
    %v363 = vunpack.c.l.b16 %v292
    %v364 = vunpack.c.l.b16 %v293
    %v365 = vunpack.c.l.b16 %v294
    %v366 = vunpack.c.l.b16 %v295
    %v367 = vunpack.c.l.b16 %v296
    %v368 = vunpack.c.l.b16 %v297
    %v369 = vunpack.c.l.b16 %v298
    %v370 = vunpack.c.l.b16 %v299
    %v371 = vpack.c.b16 %v340, %v339
    %v372 = vpack.c.b16 %v342, %v341
    %v373 = vpack.c.b16 %v344, %v343
    %v374 = vpack.c.b16 %v346, %v345
    %v375 = vpack.c.b16 %v348, %v347
    %v376 = vpack.c.b16 %v350, %v349
    %v377 = vpack.c.b16 %v352, %v351
    %v378 = vpack.c.b16 %v354, %v353
    %v379 = vpack.c.b16 %v356, %v355
    %v380 = vpack.c.b16 %v358, %v357
    %v381 = vpack.c.b16 %v360, %v359
    %v382 = vpack.c.b16 %v362, %v361
    %v383 = vpack.c.b16 %v364, %v363
    %v384 = vpack.c.b16 %v366, %v365
    %v385 = vpack.c.b16 %v368, %v367
    %v386 = vpack.c.b16 %v370, %v369
    %403 = vmatprep.subr.bf16.mxu0 0
    %404 = vmatpush1.bf16.msra.mxu0 %v371
    %405 = vmatprep.subr.bf16.mxu0 0
    %406 = vmatpush1.bf16.msra.mxu0 %v372
    %407 = vmatprep.subr.bf16.mxu0 0
    %408 = vmatpush1.bf16.msra.mxu0 %v373
    %409 = vmatprep.subr.bf16.mxu0 0
    %410 = vmatpush1.bf16.msra.mxu0 %v374
    %411 = vmatprep.subr.bf16.mxu0 0
    %412 = vmatpush1.bf16.msra.mxu0 %v375
    %413 = vmatprep.subr.bf16.mxu0 0
    %414 = vmatpush1.bf16.msra.mxu0 %v376
    %415 = vmatprep.subr.bf16.mxu0 0
    %416 = vmatpush1.bf16.msra.mxu0 %v377
    %417 = vmatprep.subr.bf16.mxu0 0
    %418 = vmatpush1.bf16.msra.mxu0 %v378
    %419 = vmatprep.subr.bf16.mxu0 0
    %420 = vmatpush1.bf16.msra.mxu0 %v379
    %421 = vmatprep.subr.bf16.mxu0 0
    %422 = vmatpush1.bf16.msra.mxu0 %v380
    %423 = vmatprep.subr.bf16.mxu0 0
    %424 = vmatpush1.bf16.msra.mxu0 %v381
    %425 = vmatprep.subr.bf16.mxu0 0
    %426 = vmatpush1.bf16.msra.mxu0 %v382
    %427 = vmatprep.subr.bf16.mxu0 0
    %428 = vmatpush1.bf16.msra.mxu0 %v383
    %429 = vmatprep.subr.bf16.mxu0 0
    %430 = vmatpush1.bf16.msra.mxu0 %v384
    %431 = vmatprep.subr.bf16.mxu0 0
    %432 = vmatpush1.bf16.msra.mxu0 %v385
    %433 = vmatprep.subr.bf16.mxu0 0
    %434 = vmatpush1.bf16.msra.mxu0 %v386
    %435 = vmatprep.mubr.bf16.mxu0 %v267
    %436 = vmatmul.mubr.bf16.gmra.mrb[0].mxu0 %v266
    %v437 = vpop.f32.mrb[0].mxu0
    %v438 = vadd.f32 %v305, %v437
    %v439 = vpop.f32.mrb[0].mxu0
    %v440 = vpop.f32.mrb[0].mxu0
    %v441 = vpop.f32.mrb[0].mxu0
    %442 = vdwg.mxu0
    %v443 = vmax.f32 %v438, 0.0
    %v444 = vpack.c.bf16 %v443, %v443
    %v445 = vld [vmem:[#allocation9] sm:$0xf]
    %v446 = vld [vmem:[#allocation9 + $0x4] sm:$0xf]
    %v447 = vld [vmem:[#allocation9 + $0x8] sm:$0xf]
    %v448 = vld [vmem:[#allocation9 + $0xc] sm:$0xf]
    %v449 = vld [vmem:[#allocation9 + $0x10] sm:$0xf]
    %v450 = vld [vmem:[#allocation9 + $0x14] sm:$0xf]
    %v451 = vld [vmem:[#allocation9 + $0x18] sm:$0xf]
    %v452 = vld [vmem:[#allocation9 + $0x1c] sm:$0xf]
    %v453 = vld [vmem:[#allocation9 + $0x20] sm:$0xf]
    %v454 = vld [vmem:[#allocation9 + $0x24] sm:$0xf]
    %v455 = vld [vmem:[#allocation9 + $0x28] sm:$0xf]
    %v456 = vld [vmem:[#allocation9 + $0x2c] sm:$0xf]
    %v457 = vld [vmem:[#allocation9 + $0x30] sm:$0xf]
    %v458 = vld [vmem:[#allocation9 + $0x34] sm:$0xf]
    %v459 = vld [vmem:[#allocation9 + $0x38] sm:$0xf]
    %v460 = vld [vmem:[#allocation9 + $0x3c] sm:$0xf]
    %v461 = vld [vmem:[#allocation10] sm:$0x1]
    %v463 = vlaneseq
    %v464 = vshrl.u32 %v463, 7
    %v465 = vsub.s32 0, %v464
    %v466 = vrot.slane %v461, %v465
    %v484 = vunpack.c.l.b16 %v445
    %v485 = vunpack.c.l.b16 %v446
    %v486 = vunpack.c.l.b16 %v447
    %v487 = vunpack.c.l.b16 %v448
    %v488 = vunpack.c.l.b16 %v449
    %v489 = vunpack.c.l.b16 %v450
    %v490 = vunpack.c.l.b16 %v451
    %v491 = vunpack.c.l.b16 %v452
    %v492 = vunpack.c.l.b16 %v453
    %v493 = vunpack.c.l.b16 %v454
    %v494 = vunpack.c.l.b16 %v455
    %v495 = vunpack.c.l.b16 %v456
    %v496 = vunpack.c.l.b16 %v457
    %v497 = vunpack.c.l.b16 %v458
    %v498 = vunpack.c.l.b16 %v459
    %v499 = vunpack.c.l.b16 %v460
    %v500 = vpack.c.b16 %v485, %v484
    %v501 = vpack.c.b16 %v487, %v486
    %v502 = vpack.c.b16 %v489, %v488
    %v503 = vpack.c.b16 %v491, %v490
    %v504 = vpack.c.b16 %v493, %v492
    %v505 = vpack.c.b16 %v495, %v494
    %v506 = vpack.c.b16 %v497, %v496
    %v507 = vpack.c.b16 %v499, %v498
    %516 = vmatprep.subr.bf16.mxu0 0
    %517 = vmatpush1.bf16.msra.mxu0 %v500
    %518 = vmatprep.subr.bf16.mxu0 0
    %519 = vmatpush1.bf16.msra.mxu0 %v501
    %520 = vmatprep.subr.bf16.mxu0 0
    %521 = vmatpush1.bf16.msra.mxu0 %v502
    %522 = vmatprep.subr.bf16.mxu0 0
    %523 = vmatpush1.bf16.msra.mxu0 %v503
    %524 = vmatprep.subr.bf16.mxu0 0
    %525 = vmatpush1.bf16.msra.mxu0 %v504
    %526 = vmatprep.subr.bf16.mxu0 0
    %527 = vmatpush1.bf16.msra.mxu0 %v505
    %528 = vmatprep.subr.bf16.mxu0 0
    %529 = vmatpush1.bf16.msra.mxu0 %v506
    %530 = vmatprep.subr.bf16.mxu0 0
    %531 = vmatpush1.bf16.msra.mxu0 %v507
    %532 = vmatprep.subr.bf16.mxu0 0
    %533 = vmatpush1.bf16.msra.mxu0 0
    %534 = vmatprep.subr.bf16.mxu0 0
    %535 = vmatpush1.bf16.msra.mxu0 0
    %536 = vmatprep.subr.bf16.mxu0 0
    %537 = vmatpush1.bf16.msra.mxu0 0
    %538 = vmatprep.subr.bf16.mxu0 0
    %539 = vmatpush1.bf16.msra.mxu0 0
    %540 = vmatprep.subr.bf16.mxu0 0
    %541 = vmatpush1.bf16.msra.mxu0 0
    %542 = vmatprep.subr.bf16.mxu0 0
    %543 = vmatpush1.bf16.msra.mxu0 0
    %544 = vmatprep.subr.bf16.mxu0 0
    %545 = vmatpush1.bf16.msra.mxu0 0
    %546 = vmatprep.subr.bf16.mxu0 0
    %547 = vmatpush1.bf16.msra.mxu0 0
    %548 = vmatprep.mubr.bf16.mxu0 0
    %549 = vmatmul.mubr.bf16.gmra.mrb[0].mxu0 %v444
    %v550 = vpop.f32.mrb[0].mxu0
    %v551 = vadd.f32 %v466, %v550
    %v552 = vpop.f32.mrb[0].mxu0
    %v553 = vpop.f32.mrb[0].mxu0
    %v554 = vpop.f32.mrb[0].mxu0
    %555 = vdwg.mxu0
    %v556 = vmax.f32 %v551, 0.0
    %v557 = vpack.c.bf16 %v556, %v556
    %v558 = vld [vmem:[%s7] sm:$0xf]
    %v559 = vld [vmem:[%s7 + $0x4] sm:$0xf]
    %v560 = vld [vmem:[%s7 + $0x8] sm:$0xf]
    %v561 = vld [vmem:[%s7 + $0xc] sm:$0xf]
    %v562 = vld [vmem:[%s7 + $0x10] sm:$0xf]
    %v563 = vld [vmem:[%s7 + $0x14] sm:$0xf]
    %v564 = vld [vmem:[%s7 + $0x18] sm:$0xf]
    %v565 = vld [vmem:[%s7 + $0x1c] sm:$0xf]
    %v566 = vld [vmem:[#allocation12] sm:$0x1]
    %v568 = vlaneseq
    %v569 = vshrl.u32 %v568, 7
    %v570 = vsub.s32 0, %v569
    %v571 = vrot.slane %v566, %v570
    %v581 = vunpack.c.l.b16 %v558
    %v582 = vunpack.c.l.b16 %v559
    %v583 = vunpack.c.l.b16 %v560
    %v584 = vunpack.c.l.b16 %v561
    %v585 = vunpack.c.l.b16 %v562
    %v586 = vunpack.c.l.b16 %v563
    %v587 = vunpack.c.l.b16 %v564
    %v588 = vunpack.c.l.b16 %v565
    %v589 = vpack.c.b16 %v582, %v581
    %v590 = vpack.c.b16 %v584, %v583
    %v591 = vpack.c.b16 %v586, %v585
    %v592 = vpack.c.b16 %v588, %v587
    %vm597 = vcmask 523264
    %v599 = vsel %vm597, %v557, 0
    %601 = vmatprep.subr.bf16.mxu0 0
    %602 = vmatpush1.bf16.msra.mxu0 %v589
    %603 = vmatprep.subr.bf16.mxu0 0
    %604 = vmatpush1.bf16.msra.mxu0 %v590
    %605 = vmatprep.subr.bf16.mxu0 0
    %606 = vmatpush1.bf16.msra.mxu0 %v591
    %607 = vmatprep.subr.bf16.mxu0 0
    %608 = vmatpush1.bf16.msra.mxu0 %v592
    %609 = vmatprep.subr.bf16.mxu0 0
    %610 = vmatpush1.bf16.msra.mxu0 0
    %611 = vmatprep.subr.bf16.mxu0 0
    %612 = vmatpush1.bf16.msra.mxu0 0
    %613 = vmatprep.subr.bf16.mxu0 0
    %614 = vmatpush1.bf16.msra.mxu0 0
    %615 = vmatprep.subr.bf16.mxu0 0
    %616 = vmatpush1.bf16.msra.mxu0 0
    %617 = vmatprep.subr.bf16.mxu0 0
    %618 = vmatpush1.bf16.msra.mxu0 0
    %619 = vmatprep.subr.bf16.mxu0 0
    %620 = vmatpush1.bf16.msra.mxu0 0
    %621 = vmatprep.subr.bf16.mxu0 0
    %622 = vmatpush1.bf16.msra.mxu0 0
    %623 = vmatprep.subr.bf16.mxu0 0
    %624 = vmatpush1.bf16.msra.mxu0 0
    %625 = vmatprep.subr.bf16.mxu0 0
    %626 = vmatpush1.bf16.msra.mxu0 0
    %627 = vmatprep.subr.bf16.mxu0 0
    %628 = vmatpush1.bf16.msra.mxu0 0
    %629 = vmatprep.subr.bf16.mxu0 0
    %630 = vmatpush1.bf16.msra.mxu0 0
    %631 = vmatprep.subr.bf16.mxu0 0
    %632 = vmatpush1.bf16.msra.mxu0 0
    %633 = vmatprep.mubr.bf16.mxu0 0
    %634 = vmatmul.mubr.bf16.gmra.mrb[0].mxu0 %v599
    %v635 = vpop.f32.mrb[0].mxu0
    %v636 = vadd.f32 %v571, %v635
    %v637 = vpop.f32.mrb[0].mxu0
    %v638 = vpop.f32.mrb[0].mxu0
    %v639 = vpop.f32.mrb[0].mxu0
    %640 = vdwg.mxu0
    %v641 = vlaneseq
    %v642 = vand.u32 %v641, 127
    %vm643 = vcmp.ge.s32.totalorder %v642, 0
    %vm644 = vcmp.lt.s32.totalorder %v642, 10
    %vm645 = vmand %vm643, %vm644
    %vm646 = vcmp.ge.s32.totalorder %v642, 10
    %vm647 = vcmp.lt.s32.totalorder %v642, 15
    %vm648 = vmand %vm646, %vm647
    %vm649 = vcmp.ge.s32.totalorder %v642, 15
    %vm650 = vcmp.le.s32.totalorder %v642, 17
    %vm651 = vmand %vm649, %vm650
    %vm652 = vcmp.ge.s32.totalorder %v642, 18
    %vm653 = vcmp.lt.s32.totalorder %v642, 68
    %vm654 = vmand %vm652, %vm653
    %v655 = vsel %vm645, %v636, -inf
    %656 = vmax.xlane.f32.xlu0 %v655
    %v657 = vpop.xlane.xlu0 %656
    %v658 = vsub.f32 %v636, %v657
    %v659 = vmul.f32 %v658, 1.442695
    %v660 = vpow.pop %v659
    %v661 = vsel %vm645, %v660, 0.0
    %662 = vadd.xlane.f32.xlu0 %v661
    %v663 = vpop.xlane.xlu0 %662
    %v664 = vrcp.pop %v663
    %v665 = vmul.f32 %v661, %v664
    %v666 = vsel %vm648, %v636, -inf
    %667 = vmax.xlane.f32.xlu0 %v666
    %v668 = vpop.xlane.xlu0 %667
    %v669 = vsub.f32 %v636, %v668
    %v670 = vmul.f32 %v669, 1.442695
    %v671 = vpow.pop %v670
    %v672 = vsel %vm648, %v671, 0.0
    %673 = vadd.xlane.f32.xlu0 %v672
    %v674 = vpop.xlane.xlu0 %673
    %v675 = vrcp.pop %v674
    %v676 = vmul.f32 %v672, %v675
    %v677 = vsub.f32 0.0, %v636
    %v678 = vmul.f32 %v677, 1.442695
    %v679 = vpow.pop %v678
    %v680 = vadd.f32 %v679, 1.0
    %v681 = vrcp.pop %v680
    %v682 = vmax.f32 %v681, 0.0
    %v683 = vmin.f32 %v682, 1.0
    %v684 = vtanh.pop %v636
    %v685 = vsel %vm645, %v665, 0.0
    %v686 = vsel %vm648, %v676, %v685
    %v687 = vsel %vm651, %v683, %v686
    %v688 = vsel %vm654, %v684, %v687
    %v689 = vpack.c.bf16 %v688, %v688
    %690 = vst [vmem:[%s9] sm:$0xf] %v689
    // Predicated region
    $region66: #{_lambda_.1} parent=1 // pred_check
      _
    $region67: #{_lambda_.1} parent=1 // pred_check_branch
      %692 = sbr.rel (0) target = $region69
    $region68: #{_lambda_.1} parent=1 // pred_region
      _
    $region69: #{_lambda_.1} parent=1 // pred_fallthru
      _
    // Predicated region
    $region70: #{_lambda_.1} parent=1 // pred_check
      _
    $region71: #{_lambda_.1} parent=1 // pred_check_branch
      %694 = sbr.rel (0) target = $region73
    $region72: #{_lambda_.1} parent=1 // pred_region
      _
    $region73: #{_lambda_.1} parent=1 // pred_fallthru
      _
    %695 = vsyncpa [#allocation3], 1
    %696 = vsyncpa [#allocation5], 1
    %697 = vsyncpa [#allocation8], 1
    %698 = vsyncpa [#allocation11], 1

</llo_original>
